<compile_context>
chip_gen: v7x
topology: tpu7x:2x2x1
jax: 0.10.0
libtpu: 0.0.40
codegen_flags: <defaults>
</compile_context>

<pallas_src>
import jax
import jax.numpy as jnp
from jax.experimental import pallas as pl
from jax.experimental.pallas import tpu as pltpu


# ---------------------------------------------------------------------------
# Chip detection / per-generation tiling defaults.
# ---------------------------------------------------------------------------
def _tpu_generation():
    try:
        dev = jax.devices()[0]
        if dev.platform != "tpu":
            return None
        kind = dev.device_kind.lower()
        for gen in (7, 6, 5, 4):
            if f"v{gen}" in kind or f" {gen}x" in kind:
                return gen
    except Exception:
        pass
    return None


def _chip_config():
    gen = _tpu_generation()
    if gen is not None and gen >= 7:
        # v7x: 2 TensorCores per chip, 64 MiB VMEM per TC, ~3.2 TB/s HBM.
        return dict(max_tile_bytes=6 << 20, vmem_limit_bytes=48 << 20,
                    num_parallel=2, core_parallel=True)
    if gen == 6:
        # v6e: single TC, 32 MiB scoped-VMEM default -> 4 MiB tiles fit as-is.
        return dict(max_tile_bytes=4 << 20, vmem_limit_bytes=None,
                    num_parallel=1, core_parallel=False)
    # v5e and anything unknown: stay within the 16 MiB scoped-VMEM default.
    return dict(max_tile_bytes=2 << 20, vmem_limit_bytes=None,
                num_parallel=1, core_parallel=False)


# ---------------------------------------------------------------------------
# Kernel: mask-free streaming per-row sum of two tiles into resident outputs.
# ---------------------------------------------------------------------------
def _row_sum_kernel(x_ref, y_ref, ox_ref, oy_ref):
    k = pl.program_id(2)  # reduction step along the flattened H*W axis

    @pl.when(k == 0)
    def _():
        ox_ref[...] = jnp.zeros_like(ox_ref)
        oy_ref[...] = jnp.zeros_like(oy_ref)

    # Cast per tile inside the kernel so bf16 inputs stream at native width.
    x = x_ref[...].astype(jnp.float32)          # (tr, tile_hw)
    y = y_ref[...].astype(jnp.float32)
    ox_ref[...] += jnp.sum(x, axis=-1, keepdims=True)[None]   # (1, tr, 1)
    oy_ref[...] += jnp.sum(y, axis=-1, keepdims=True)[None]


def _channel_sums_pallas(x2d, y2d, *, tile_hw, tr, n_inner, P,
                         core_parallel, vmem_limit_bytes):
    """Per-row sums over the first n_inner*P*tile_hw lanes of (R_pad, HW) arrays."""
    R_pad = x2d.shape[0]
    n_rb = R_pad // tr

    def in_idx(p, r, k):
        return (r, p * n_inner + k)        # always in-bounds: P*n_inner tiles exist

    def out_idx(p, r, k):
        return (p, r, 0)                   # resident across the reduction axis k

    first = pltpu.CORE_PARALLEL if (core_parallel and P > 1) else pltpu.PARALLEL
    cp_kwargs = dict(dimension_semantics=(first, pltpu.PARALLEL, pltpu.ARBITRARY))
    if vmem_limit_bytes is not None:
        cp_kwargs["vmem_limit_bytes"] = vmem_limit_bytes

    sums_x, sums_y = pl.pallas_call(
        _row_sum_kernel,
        out_shape=(
            jax.ShapeDtypeStruct((P, R_pad, 1), jnp.float32),
            jax.ShapeDtypeStruct((P, R_pad, 1), jnp.float32),
        ),
        grid_spec=pltpu.PrefetchScalarGridSpec(
            num_scalar_prefetch=0,
            grid=(P, n_rb, n_inner),
            in_specs=[
                pl.BlockSpec((tr, tile_hw), in_idx),
                pl.BlockSpec((tr, tile_hw), in_idx),
            ],
            out_specs=[
                pl.BlockSpec((1, tr, 1), out_idx),
                pl.BlockSpec((1, tr, 1), out_idx),
            ],
        ),
        compiler_params=pltpu.CompilerParams(**cp_kwargs),
    )(x2d, y2d)

    # Combine the (tiny) per-core partial sums.
    return sums_x.sum(axis=0)[:, 0], sums_y.sum(axis=0)[:, 0]   # (R_pad,)


# ---------------------------------------------------------------------------
# Public entry point.
# ---------------------------------------------------------------------------
def r_i_color(x, y, *, max_tile_bytes=None, num_parallel=None,
              vmem_limit_bytes=None):
    """x, y: (N, 3, H, W) NCHW images (f32 or bf16). Returns scalar k (float32)."""
    N, C, H, W = x.shape
    assert y.shape == x.shape
    assert C == 3, "R_I_color expects RGB inputs (C == 3)"
    hw = H * W
    R = N * C

    cfg = _chip_config()
    if max_tile_bytes is None:
        max_tile_bytes = cfg["max_tile_bytes"]
    if num_parallel is None:
        num_parallel = cfg["num_parallel"]
    if vmem_limit_bytes is None:
        vmem_limit_bytes = cfg["vmem_limit_bytes"]
    core_parallel = cfg["core_parallel"]

    x2d = x.reshape(R, hw)                      # dense lane-major view, no copy
    y2d = y.reshape(R, hw)
    itemsize = max(jnp.dtype(x.dtype).itemsize, jnp.dtype(y.dtype).itemsize)

    # ---- choose lane tile (multiple of 128) and row block (mult of 8 or R) ----
    tile_hw = 0
    tr = R
    R_pad = R
    hw128 = (hw // 128) * 128
    if hw128 >= 128 and R > 0:
        cap_lane = ((max_tile_bytes // max(R * itemsize, 1)) // 128) * 128
        if cap_lane >= min(512, hw128):
            # Full rows per block; biggest lane tile within the VMEM budget.
            tile_hw = min(cap_lane, hw128)
        else:
            # Large batch: block over rows so per-buffer VMEM stays bounded.
            tile_hw = min(512, hw128)
            tr = max(8, ((max_tile_bytes // (tile_hw * itemsize)) // 8) * 8)
            tr = min(tr, ((R + 7) // 8) * 8)
            R_pad = ((R + tr - 1) // tr) * tr

    n_tiles_total = (hw // tile_hw) if tile_hw > 0 else 0
    P = num_parallel if (num_parallel > 1 and n_tiles_total >= num_parallel) else 1
    n_inner = n_tiles_total // P
    n_tiles = n_inner * P                       # P always divides n_tiles exactly
    hw_main = n_tiles * tile_hw                 # lanes streamed by the kernel

    if n_tiles > 0:
        if R_pad != R:
            # TODO(synk): a ragged-row kernel path would avoid this pad copy for
            # very large batches; padded rows are zero so sums are unaffected.
            x2d_k = jnp.pad(x2d, ((0, R_pad - R), (0, 0)))
            y2d_k = jnp.pad(y2d, ((0, R_pad - R), (0, 0)))
        else:
            x2d_k, y2d_k = x2d, y2d
        sx, sy = _channel_sums_pallas(
            x2d_k, y2d_k, tile_hw=tile_hw, tr=tr, n_inner=n_inner, P=P,
            core_parallel=core_parallel, vmem_limit_bytes=vmem_limit_bytes)
        sx = sx[:R]
        sy = sy[:R]
    else:
        sx = jnp.zeros((R,), jnp.float32)
        sy = jnp.zeros((R,), jnp.float32)

    # Ragged tail (fewer than 2 lane tiles): plain JAX reduction, no in-kernel mask.
    if hw_main < hw:
        sx = sx + jnp.sum(x2d[:, hw_main:].astype(jnp.float32), axis=-1)
        sy = sy + jnp.sum(y2d[:, hw_main:].astype(jnp.float32), axis=-1)

    # Per-(image, channel) means; divide once by H*W.
    mx = (sx / hw).reshape(N, C)
    my = (sy / hw).reshape(N, C)

    # Tiny scalar epilogue in plain JAX (mirrors the PyTorch module exactly).
    Drgx = jnp.mean(jnp.abs(mx[:, 0] - mx[:, 1]))
    Drbx = jnp.mean(jnp.abs(mx[:, 0] - mx[:, 2]))
    Dgbx = jnp.mean(jnp.abs(mx[:, 2] - mx[:, 1]))
    Drgy = jnp.mean(jnp.abs(my[:, 0] - my[:, 1]))
    Drby = jnp.mean(jnp.abs(my[:, 0] - my[:, 2]))
    Dgby = jnp.mean(jnp.abs(my[:, 2] - my[:, 1]))
    return jnp.abs(Drgx - Drgy) + jnp.abs(Drbx - Drby) + jnp.abs(Dgbx - Dgby)


# ---------------------------------------------------------------------------
# Pure-JAX reference mirroring the PyTorch module.
# ---------------------------------------------------------------------------
def _r_i_color_ref(x, y):
    xm = jnp.mean(x.astype(jnp.float32), axis=(2, 3))  # (N, 3)
    ym = jnp.mean(y.astype(jnp.float32), axis=(2, 3))
    Drgx = jnp.mean(jnp.abs(xm[:, 0] - xm[:, 1]))
    Drbx = jnp.mean(jnp.abs(xm[:, 0] - xm[:, 2]))
    Dgbx = jnp.mean(jnp.abs(xm[:, 2] - xm[:, 1]))
    Drgy = jnp.mean(jnp.abs(ym[:, 0] - ym[:, 1]))
    Drby = jnp.mean(jnp.abs(ym[:, 0] - ym[:, 2]))
    Dgby = jnp.mean(jnp.abs(ym[:, 2] - ym[:, 1]))
    return jnp.abs(Drgx - Drgy) + jnp.abs(Drbx - Drby) + jnp.abs(Dgbx - Dgby)


if __name__ == "__main__":
    key = jax.random.PRNGKey(0)

    # Test 1: default chip-tuned path (single lane tile, grid (1,1,1)).
    kx, ky, key = jax.random.split(key, 3)
    N, C, H, W = 2, 3, 16, 16
    x = jax.random.uniform(kx, (N, C, H, W), dtype=jnp.float32)
    y = jax.random.uniform(ky, (N, C, H, W), dtype=jnp.float32)
    k_out = jax.block_until_ready(r_i_color(x, y))
    k_ref = jax.block_until_ready(_r_i_color_ref(x, y))
    assert jnp.allclose(k_out, k_ref, atol=1e-5, rtol=1e-5), (k_out, k_ref)

    # Test 2: force a tiny tile budget to exercise the row-blocked (padded rows),
    # multi-step reduction and JAX ragged-tail paths (H*W = 1320, not mult of 128).
    kx2, ky2, key = jax.random.split(key, 3)
    N2, H2, W2 = 2, 40, 33
    x2 = jax.random.uniform(kx2, (N2, 3, H2, W2), dtype=jnp.float32)
    y2 = jax.random.uniform(ky2, (N2, 3, H2, W2), dtype=jnp.float32)
    k_out2 = jax.block_until_ready(r_i_color(x2, y2, max_tile_bytes=4096))
    k_ref2 = jax.block_until_ready(_r_i_color_ref(x2, y2))
    assert jnp.allclose(k_out2, k_ref2, atol=1e-5, rtol=1e-5), (k_out2, k_ref2)

    # Test 3: bf16 inputs stream at native width (cast to f32 per tile in-kernel).
    kx3, ky3, _ = jax.random.split(key, 3)
    x3 = jax.random.uniform(kx3, (2, 3, 32, 32), dtype=jnp.float32).astype(jnp.bfloat16)
    y3 = jax.random.uniform(ky3, (2, 3, 32, 32), dtype=jnp.float32).astype(jnp.bfloat16)
    k_out3 = jax.block_until_ready(r_i_color(x3, y3))
    k_ref3 = jax.block_until_ready(_r_i_color_ref(x3, y3))
    assert jnp.allclose(k_out3, k_ref3, atol=1e-3, rtol=1e-3), (k_out3, k_ref3)

    print("KERNEL_OK")
</pallas_src>

<mosaic_0001>
module attributes {stable_mosaic.version = 11 : i64} {
  func.func @_row_sum_kernel(%arg0: i32, %arg1: i32, %arg2: i32, %arg3: memref<6x256xf32, #tpu.memory_space<vmem>>, %arg4: memref<6x256xf32, #tpu.memory_space<vmem>>, %arg5: memref<1x6x1xf32, #tpu.memory_space<vmem>>, %arg6: memref<1x6x1xf32, #tpu.memory_space<vmem>>) attributes {dimension_semantics = [#tpu.dimension_semantics<parallel>, #tpu.dimension_semantics<parallel>, #tpu.dimension_semantics<arbitrary>], iteration_bounds = array<i64: 1, 1, 1>, scalar_prefetch = 0 : i64, scratch_operands = 0 : i64, tpu.core_type = #tpu.core_type<tc>, window_params = [{transform_indices = @transform_0, window_bounds = array<i64: 6, 256>}, {transform_indices = @transform_1, window_bounds = array<i64: 6, 256>}, {transform_indices = @transform_2, window_bounds = array<i64: 1, 6, 1>}, {transform_indices = @transform_3, window_bounds = array<i64: 1, 6, 1>}]} {
    %c0_i32 = arith.constant 0 : i32
    %0 = arith.cmpi eq, %arg2, %c0_i32 : i32
    %1 = arith.extui %0 : i1 to i32
    %c0_i32_0 = arith.constant 0 : i32
    %2 = arith.cmpi ne, %1, %c0_i32_0 : i32
    scf.if %2 {
      %cst_17 = arith.constant 0.000000e+00 : f32
      %17 = vector.broadcast %cst_17 : f32 to vector<1x6x1xf32>
      %c0_18 = arith.constant 0 : index
      %c0_19 = arith.constant 0 : index
      %c0_20 = arith.constant 0 : index
      %18 = vector.load %arg5[%c0_18, %c0_19, %c0_20] : memref<1x6x1xf32, #tpu.memory_space<vmem>>, vector<1x6x1xf32>
      tpu.vector_store %arg5[%c0_18, %c0_19, %c0_20], %17 {strides = array<i32>} : memref<1x6x1xf32, #tpu.memory_space<vmem>>, vector<1x6x1xf32>,
      %cst_21 = arith.constant 0.000000e+00 : f32
      %19 = vector.broadcast %cst_21 : f32 to vector<1x6x1xf32>
      %c0_22 = arith.constant 0 : index
      %c0_23 = arith.constant 0 : index
      %c0_24 = arith.constant 0 : index
      %20 = vector.load %arg6[%c0_22, %c0_23, %c0_24] : memref<1x6x1xf32, #tpu.memory_space<vmem>>, vector<1x6x1xf32>
      tpu.vector_store %arg6[%c0_22, %c0_23, %c0_24], %19 {strides = array<i32>} : memref<1x6x1xf32, #tpu.memory_space<vmem>>, vector<1x6x1xf32>,
    } else {
    }
    %c0 = arith.constant 0 : index
    %c0_1 = arith.constant 0 : index
    %3 = vector.load %arg3[%c0, %c0_1] : memref<6x256xf32, #tpu.memory_space<vmem>>, vector<6x256xf32>
    %c0_2 = arith.constant 0 : index
    %c0_3 = arith.constant 0 : index
    %4 = vector.load %arg4[%c0_2, %c0_3] : memref<6x256xf32, #tpu.memory_space<vmem>>, vector<6x256xf32>
    %c0_4 = arith.constant 0 : index
    %c0_5 = arith.constant 0 : index
    %c0_6 = arith.constant 0 : index
    %5 = vector.load %arg5[%c0_4, %c0_5, %c0_6] : memref<1x6x1xf32, #tpu.memory_space<vmem>>, vector<1x6x1xf32>
    %cst = arith.constant dense<0.000000e+00> : vector<6xf32>
    %6 = vector.multi_reduction <add>, %3, %cst [1] : vector<6x256xf32> to vector<6xf32>
    %7 = vector.shape_cast %6 : vector<6xf32> to vector<6x1xf32>
    %8 = vector.shape_cast %7 : vector<6x1xf32> to vector<1x6x1xf32>
    %9 = arith.addf %5, %8 : vector<1x6x1xf32>
    %c0_7 = arith.constant 0 : index
    %c0_8 = arith.constant 0 : index
    %c0_9 = arith.constant 0 : index
    %10 = vector.load %arg5[%c0_7, %c0_8, %c0_9] : memref<1x6x1xf32, #tpu.memory_space<vmem>>, vector<1x6x1xf32>
    tpu.vector_store %arg5[%c0_7, %c0_8, %c0_9], %9 {strides = array<i32>} : memref<1x6x1xf32, #tpu.memory_space<vmem>>, vector<1x6x1xf32>,
    %c0_10 = arith.constant 0 : index
    %c0_11 = arith.constant 0 : index
    %c0_12 = arith.constant 0 : index
    %11 = vector.load %arg6[%c0_10, %c0_11, %c0_12] : memref<1x6x1xf32, #tpu.memory_space<vmem>>, vector<1x6x1xf32>
    %cst_13 = arith.constant dense<0.000000e+00> : vector<6xf32>
    %12 = vector.multi_reduction <add>, %4, %cst_13 [1] : vector<6x256xf32> to vector<6xf32>
    %13 = vector.shape_cast %12 : vector<6xf32> to vector<6x1xf32>
    %14 = vector.shape_cast %13 : vector<6x1xf32> to vector<1x6x1xf32>
    %15 = arith.addf %11, %14 : vector<1x6x1xf32>
    %c0_14 = arith.constant 0 : index
    %c0_15 = arith.constant 0 : index
    %c0_16 = arith.constant 0 : index
    %16 = vector.load %arg6[%c0_14, %c0_15, %c0_16] : memref<1x6x1xf32, #tpu.memory_space<vmem>>, vector<1x6x1xf32>
    tpu.vector_store %arg6[%c0_14, %c0_15, %c0_16], %15 {strides = array<i32>} : memref<1x6x1xf32, #tpu.memory_space<vmem>>, vector<1x6x1xf32>,
    return
  }
  func.func @transform_0(%arg0: i32, %arg1: i32, %arg2: i32) -> (i32, i32) {
    %c1_i32 = arith.constant 1 : i32
    %0 = arith.muli %arg0, %c1_i32 : i32
    %1 = arith.addi %0, %arg2 : i32
    %c0_i32 = arith.constant 0 : i32
    return %arg1, %1 : i32, i32
  }
  func.func @transform_1(%arg0: i32, %arg1: i32, %arg2: i32) -> (i32, i32) {
    %c1_i32 = arith.constant 1 : i32
    %0 = arith.muli %arg0, %c1_i32 : i32
    %1 = arith.addi %0, %arg2 : i32
    %c0_i32 = arith.constant 0 : i32
    return %arg1, %1 : i32, i32
  }
  func.func @transform_2(%arg0: i32, %arg1: i32, %arg2: i32) -> (i32, i32, i32) {
    %c0_i32 = arith.constant 0 : i32
    %c0_i32_0 = arith.constant 0 : i32
    return %arg0, %arg1, %c0_i32 : i32, i32, i32
  }
  func.func @transform_3(%arg0: i32, %arg1: i32, %arg2: i32) -> (i32, i32, i32) {
    %c0_i32 = arith.constant 0 : i32
    %c0_i32_0 = arith.constant 0 : i32
    return %arg0, %arg1, %c0_i32 : i32, i32, i32
  }
}

</mosaic_0001>

<llo_original>
// kernel: tpu_custom_call.1
$region0: #{tpu_custom_call.1}
  #allocation0 [shape = 'u32[]', space=smem, size = 0x4, offset = 0x4, fixed_abs, tag = 'smem constant byte address 0x4 - core index']
  #allocation1 [shape = 'u32[144,128]{1,0:T(1,128)}', space=vmem, size = 0x12000, scoped, tag = 'internal scratch']
  %s0 = inlined_call_operand.hbm [shape: f32[6,256], index: 0, kind: input, shape index: {}]
  %s1 = inlined_call_operand.hbm [shape: f32[6,256], index: 1, kind: input, shape index: {}]
  %s2 = inlined_call_operand.vmem [shape: f32[1,6,1], index: 2, kind: output, shape index: {0}]
  %s3 = inlined_call_operand.vmem [shape: f32[1,6,1], index: 3, kind: output, shape index: {1}]
  %4 = xla_tuple %s2, %s3
  %s5 = sld [smem:[#allocation0]]
  $region38: #{tpu_custom_call.1} parent=0
    _
  %s7 = ssub.s32 1, %s5
  %s8 = scalar_select 0, %s7, %s5
  $region1: #{tpu_custom_call.1} parent=0
    #allocation2 [shape = 'u8[8192]{0}', space=vmem, size = 0x2000, scoped, tag = 'input window, operand 0, single buffered']
    #allocation3 [shape = 's32[1]{0}', space=sflag, size = 0x4, scoped, tag = 'scoped memory for tpu_custom_call.1']
    #allocation4 [shape = 'u8[8192]{0}', space=vmem, size = 0x2000, scoped, tag = 'input window, operand 1, single buffered']
    #allocation5 [shape = 's32[1]{0}', space=sflag, size = 0x4, scoped, tag = 'scoped memory for tpu_custom_call.1']
    %9 = vsyncpa [#allocation3], 0
    %10 = vsyncpa [#allocation5], 0
    // Predicated region
    $region2: #{tpu_custom_call.1} parent=1 // pred_check
      _
    $region3: #{tpu_custom_call.1} parent=1 // pred_check_branch
      %12 = sbr.rel (0) target = $region5
    $region4: #{tpu_custom_call.1} parent=1 // pred_region
      %s13 = sadd.s32 0, 0
      %s14 = smul.u32 2, %s13
      %s16 = ssub.s32 256, 256
      %17 = vsyncadd [#allocation3], %s16
      %s18 = smul.addr %s14, 128
      %s19 = scalar_lea.hbm %s0, %s18
      %s21 = sshll.u32 [#allocation2], 4
      %s22 = int_to_ptr.vmem [resolvable:$true] %s21
      %24 = dma.hbm_to_vmem [thread:$0]  %s19, 256, %s22, [#allocation3]
    $region5: #{tpu_custom_call.1} parent=1 // pred_fallthru
      _
    // Predicated region
    $region6: #{tpu_custom_call.1} parent=1 // pred_check
      _
    $region7: #{tpu_custom_call.1} parent=1 // pred_check_branch
      %26 = sbr.rel (0) target = $region9
    $region8: #{tpu_custom_call.1} parent=1 // pred_region
      %s27 = sadd.s32 0, 0
      %s28 = smul.u32 2, %s27
      %s30 = ssub.s32 256, 256
      %31 = vsyncadd [#allocation5], %s30
      %s32 = smul.addr %s28, 128
      %s33 = scalar_lea.hbm %s1, %s32
      %s35 = sshll.u32 [#allocation4], 4
      %s36 = int_to_ptr.vmem [resolvable:$true] %s35
      %38 = dma.hbm_to_vmem [thread:$0]  %s33, 256, %s36, [#allocation5]
    $region9: #{tpu_custom_call.1} parent=1 // pred_fallthru
      _
    // Predicated region
    $region10: #{tpu_custom_call.1} parent=1 // pred_check
      _
    $region11: #{tpu_custom_call.1} parent=1 // pred_check_branch
      %40 = sbr.rel (0) target = $region13
    $region12: #{tpu_custom_call.1} parent=1 // pred_region
      %41 = dma.done [#allocation3], 256
    $region13: #{tpu_custom_call.1} parent=1 // pred_fallthru
      _
    // Predicated region
    $region14: #{tpu_custom_call.1} parent=1 // pred_check
      _
    $region15: #{tpu_custom_call.1} parent=1 // pred_check_branch
      %43 = sbr.rel (0) target = $region17
    $region16: #{tpu_custom_call.1} parent=1 // pred_region
      %44 = dma.done [#allocation5], 256
    $region17: #{tpu_custom_call.1} parent=1 // pred_fallthru
      _
    %s45 = sadd.s32 0, 0
    %s46 = smul.u32 2, %s45
    %s47 = sadd.s32 0, 0
    %s48 = smul.u32 2, %s47
    %p49 = scmp.eq.s32.totalorder 0, 0
    // Predicated region
    $region18: #{tpu_custom_call.1} parent=1 // pred_check
      %p50 = pneg %p49
    $region19: #{tpu_custom_call.1} parent=1 // pred_check_branch
      %52 = sbr.rel (%p50) target = $region21
    $region20: #{tpu_custom_call.1} parent=1 // pred_region
      %vm53 = vcmask 5120
      %54 = vst.msk [vmem:[%s2] sm:$0x3f] %vm53, 0.0
      %55 = vst.msk [vmem:[%s3] sm:$0x3f] %vm53, 0.0
    $region21: #{tpu_custom_call.1} parent=1 // pred_fallthru
      _
    %v56 = vld [vmem:[#allocation2] sm:$0x3f]
    %v57 = vld [vmem:[#allocation2 + $0x8] sm:$0x3f]
    %v58 = vld [vmem:[#allocation4] sm:$0x3f]
    %v59 = vld [vmem:[#allocation4 + $0x8] sm:$0x3f]
    %v60 = vld [vmem:[%s2] sm:$0x3f]
    %vm61 = vcmask 1045504
    %v62 = vsel %vm61, %v56, 0.0
    %v63 = vsel %vm61, %v57, 0.0
    %v64 = vadd.f32 %v62, %v63
    %65 = vadd.xlane.f32.xlu0 %v64
    %v66 = vpop.xlane.xlu0 %65
    %v67 = vadd.f32 %v60, %v66
    %vm68 = vcmask 5120
    %69 = vst.msk [vmem:[%s2] sm:$0x3f] %vm68, %v67
    %v70 = vld [vmem:[%s3] sm:$0x3f]
    %v71 = vsel %vm61, %v58, 0.0
    %v72 = vsel %vm61, %v59, 0.0
    %v73 = vadd.f32 %v71, %v72
    %74 = vadd.xlane.f32.xlu0 %v73
    %v75 = vpop.xlane.xlu0 %74
    %v76 = vadd.f32 %v70, %v75
    %77 = vst.msk [vmem:[%s3] sm:$0x3f] %vm68, %v76
    // Predicated region
    $region22: #{tpu_custom_call.1} parent=1 // pred_check
      _
    $region23: #{tpu_custom_call.1} parent=1 // pred_check_branch
      %79 = sbr.rel (0) target = $region25
    $region24: #{tpu_custom_call.1} parent=1 // pred_region
      _
    $region25: #{tpu_custom_call.1} parent=1 // pred_fallthru
      _
    // Predicated region
    $region26: #{tpu_custom_call.1} parent=1 // pred_check
      _
    $region27: #{tpu_custom_call.1} parent=1 // pred_check_branch
      %81 = sbr.rel (0) target = $region29
    $region28: #{tpu_custom_call.1} parent=1 // pred_region
      _
    $region29: #{tpu_custom_call.1} parent=1 // pred_fallthru
      _
    // Predicated region
    $region30: #{tpu_custom_call.1} parent=1 // pred_check
      _
    $region31: #{tpu_custom_call.1} parent=1 // pred_check_branch
      %83 = sbr.rel (0) target = $region33
    $region32: #{tpu_custom_call.1} parent=1 // pred_region
      _
    $region33: #{tpu_custom_call.1} parent=1 // pred_fallthru
      _
    // Predicated region
    $region34: #{tpu_custom_call.1} parent=1 // pred_check
      _
    $region35: #{tpu_custom_call.1} parent=1 // pred_check_branch
      %85 = sbr.rel (0) target = $region37
    $region36: #{tpu_custom_call.1} parent=1 // pred_region
      _
    $region37: #{tpu_custom_call.1} parent=1 // pred_fallthru
      _
    %86 = vsyncpa [#allocation3], 1
    %87 = vsyncpa [#allocation5], 1

</llo_original>
